<compile_context>
chip_gen: v5e
topology: v5e:2x2
jax: 0.10.0
libtpu: 0.0.40
codegen_flags: <defaults>
</compile_context>

<pallas_src>
import math
import functools

import jax
import jax.numpy as jnp
from jax import lax
from jax.experimental import pallas as pl
from jax.experimental.pallas import tpu as pltpu


# ---------------------------------------------------------------------------
# VMEM budget: raise the default scoped limit (16 MiB v5e / 32 MiB v6e,v7x)
# while staying safely inside physical VMEM (64 MiB per TC on v7x).
# ---------------------------------------------------------------------------
def _vmem_limit_bytes():
    cap = 64 * 1024 * 1024
    try:
        info = pltpu.get_tpu_info()
        cap = int(getattr(info, "vmem_capacity_bytes", cap))
    except Exception:
        pass
    return int(min(max(cap - 8 * 1024 * 1024, 32 * 1024 * 1024), 100 * 1024 * 1024))


_VMEM_LIMIT = _vmem_limit_bytes()


# ----------------------------- Pallas kernels -------------------------------

def _linear_kernel(x_ref, w_ref, b_ref, o_ref):
    # x: (TR, Fin) any float, w: (Fin, Fout) bf16, b: (1, Fout) f32 -> o: (TR, Fout)
    x = x_ref[...].astype(jnp.bfloat16)
    acc = jnp.dot(x, w_ref[...], preferred_element_type=jnp.float32)
    o_ref[...] = (acc + b_ref[...]).astype(o_ref.dtype)


def _pick_row_block(r):
    for cand in (512, 256, 128):
        if r >= cand and r % cand == 0:
            return cand
    return r


def pallas_linear(x, w, b, out_dtype=jnp.bfloat16):
    """Row-tiled x @ w + b.  x: (R, Fin), w: (Fin, Fout) bf16, b: (1, Fout) f32."""
    R, Fin = x.shape
    Fout = w.shape[1]
    tr = _pick_row_block(R)
    return pl.pallas_call(
        _linear_kernel,
        out_shape=jax.ShapeDtypeStruct((R, Fout), out_dtype),
        grid=(R // tr,),
        in_specs=[
            pl.BlockSpec((tr, Fin), lambda i: (i, 0)),     # activation rows (pipelined)
            pl.BlockSpec((Fin, Fout), lambda i: (0, 0)),   # weight resident
            pl.BlockSpec((1, Fout), lambda i: (0, 0)),     # bias resident
        ],
        out_specs=pl.BlockSpec((tr, Fout), lambda i: (i, 0)),
        compiler_params=pltpu.CompilerParams(
            dimension_semantics=("parallel",),
            vmem_limit_bytes=_VMEM_LIMIT),
    )(x, w, b)


def _rel_attn_kernel(q_ref, kp_ref, v_ref, bias_ref, mask_ref, o_ref, *, n_head, d_k):
    # q: (t1b, F) bf16   kp/v: (T2, F) bf16   bias: (H, T2) f32   mask: (tm_b, T2) i32
    # o: (t1b, F) bf16
    t1b = q_ref.shape[0]
    t2 = kp_ref.shape[0]

    # Whole-tile reads once; per-head slicing happens on in-register values.
    q_all = q_ref[...]                 # (t1b, F)
    kp_all = kp_ref[...]               # (T2,  F)
    v_all = v_ref[...]                 # (T2,  F)
    bias_all = bias_ref[...]           # (H, T2)  rank-1 bias rows (u@k^T + v@p^T)

    keep = jnp.broadcast_to(mask_ref[...] != 0, (t1b, t2))        # hoisted
    keep_f = keep.astype(jnp.float32)                             # hoisted
    neg = jnp.where(keep, 0.0, -1e30)                             # additive mask, f32

    ctx_parts = []
    for hh in range(n_head):
        lo = hh * d_k
        q_h = q_all[:, lo:lo + d_k]        # (t1b, d_k) bf16
        kp_h = kp_all[:, lo:lo + d_k]      # (T2,  d_k) bf16
        v_h = v_all[:, lo:lo + d_k]        # (T2,  d_k) bf16

        # merged scores: q_scaled @ (k+p)^T  (contract last dims, no transpose)
        s = lax.dot_general(q_h, kp_h, (((1,), (1,)), ((), ())),
                            preferred_element_type=jnp.float32)   # (t1b, T2) f32
        s = s + bias_all[hh:hh + 1, :] + neg

        # softmax along keys (f32); finite additive mask keeps everything finite
        m = jnp.max(s, axis=-1, keepdims=True)
        e = jnp.exp(s - m)
        denom = jnp.sum(e, axis=-1, keepdims=True)
        attn = e * pl.reciprocal(denom, approx=True)
        attn = attn * keep_f               # zero masked keys / fully-masked rows

        ctx_parts.append(
            jnp.dot(attn.astype(v_h.dtype), v_h,
                    preferred_element_type=jnp.float32))          # (t1b, d_k) f32

    # single lane-dense (t1b, F) store per tile
    o_ref[...] = jnp.concatenate(ctx_parts, axis=1).astype(o_ref.dtype)


def rel_attention(q, kp, v, bias_rows, mask, n_head, d_k):
    """q: (B,T1,F) bf16, kp/v: (B,T2,F) bf16, bias_rows: (B,H,T2) f32,
    mask: (B,Tm,T2) int32 with Tm in {1, T1}.  Returns ctx (B, T1, F) bf16."""
    B, T1, F = q.shape
    T2 = kp.shape[1]
    Tm = mask.shape[1]

    t1b = T1
    for cand in (512, 256, 128):
        if T1 % cand == 0:
            t1b = cand
            break
    nT1 = T1 // t1b

    # Flattened batch-major parallel axis: i -> (b = i // nT1, t = i % nT1).
    if Tm == 1:
        mask_spec = pl.BlockSpec((None, 1, T2), lambda i: (i // nT1, 0, 0))
    else:  # per-query-row mask (B, T1, T2)
        mask_spec = pl.BlockSpec((None, t1b, T2), lambda i: (i // nT1, i % nT1, 0))

    kernel = functools.partial(_rel_attn_kernel, n_head=n_head, d_k=d_k)

    flops = 4 * B * T1 * T2 * F                      # score + context matmuls
    bytes_accessed = (2 * (2 * B * T1 * F + 2 * B * T2 * F)   # q, out, kp, v (bf16)
                      + 4 * B * n_head * T2 + 4 * B * Tm * T2)

    return pl.pallas_call(
        kernel,
        out_shape=jax.ShapeDtypeStruct((B, T1, F), jnp.bfloat16),
        grid=(B * nT1,),
        in_specs=[
            pl.BlockSpec((None, t1b, F), lambda i: (i // nT1, i % nT1, 0)),   # q tile
            pl.BlockSpec((None, T2, F), lambda i: (i // nT1, 0, 0)),          # kp resident
            pl.BlockSpec((None, T2, F), lambda i: (i // nT1, 0, 0)),          # v resident
            pl.BlockSpec((None, n_head, T2), lambda i: (i // nT1, 0, 0)),     # bias rows
            mask_spec,                                                        # mask
        ],
        out_specs=pl.BlockSpec((None, t1b, F), lambda i: (i // nT1, i % nT1, 0)),
        compiler_params=pltpu.CompilerParams(
            dimension_semantics=("parallel",),
            vmem_limit_bytes=_VMEM_LIMIT),
        cost_estimate=pl.CostEstimate(
            flops=flops,
            transcendentals=B * n_head * T1 * T2,
            bytes_accessed=bytes_accessed),
    )(q, kp, v, bias_rows, mask)


# ------------------------- Module (params + forward) ------------------------

class RelPositionMHA:
    """JAX/Pallas port of RelPositionMultiHeadedAttention (eval mode, no cache)."""

    def __init__(self, n_head, n_feat, dropout_rate, key):
        assert n_feat % n_head == 0
        self.h = n_head
        self.d_k = n_feat // n_head
        self.n_feat = n_feat
        self.dropout_rate = dropout_rate  # dropout is identity in eval mode

        ks = jax.random.split(key, 11)
        s = 1.0 / math.sqrt(n_feat)
        f32 = jnp.float32
        bf16 = jnp.bfloat16
        # f32 master parameters, stored (in, out) so x @ W + b (used by reference)
        self.w_q = (jax.random.normal(ks[0], (n_feat, n_feat)) * s).astype(f32)
        self.b_q = (jax.random.normal(ks[1], (1, n_feat)) * s).astype(f32)
        self.w_k = (jax.random.normal(ks[2], (n_feat, n_feat)) * s).astype(f32)
        self.b_k = (jax.random.normal(ks[3], (1, n_feat)) * s).astype(f32)
        self.w_v = (jax.random.normal(ks[4], (n_feat, n_feat)) * s).astype(f32)
        self.b_v = (jax.random.normal(ks[5], (1, n_feat)) * s).astype(f32)
        self.w_out = (jax.random.normal(ks[6], (n_feat, n_feat)) * s).astype(f32)
        self.b_out = (jax.random.normal(ks[7], (1, n_feat)) * s).astype(f32)
        self.w_pos = (jax.random.normal(ks[8], (n_feat, n_feat)) * s).astype(f32)  # no bias
        self.pos_bias_u = (jax.random.normal(ks[9], (self.h, self.d_k)) * s).astype(f32)
        self.pos_bias_v = (jax.random.normal(ks[10], (self.h, self.d_k)) * s).astype(f32)

        # Kernel-side copies: 1/sqrt(d_k) folded into the q path + pos biases
        # (constant fold at init), bf16 MXU operands, fused QKV precomputed.
        scale = 1.0 / math.sqrt(self.d_k)
        self._w_q_s = (self.w_q * scale).astype(bf16)
        self._b_q_s = (self.b_q * scale).astype(f32)
        self._w_k = self.w_k.astype(bf16)
        self._w_v = self.w_v.astype(bf16)
        self._w_pos = self.w_pos.astype(bf16)
        self._w_out = self.w_out.astype(bf16)
        self._pos_bias_u_s = (self.pos_bias_u * scale).astype(f32)
        self._pos_bias_v_s = (self.pos_bias_v * scale).astype(f32)
        self._w_qkv = jnp.concatenate([self._w_q_s, self._w_k, self._w_v], axis=1)
        self._b_qkv = jnp.concatenate([self._b_q_s, self.b_k, self.b_v], axis=1)
        self._zero_bias = jnp.zeros((1, n_feat), f32)

    def __call__(self, query, key, value, mask, pos_emb, need_cache=True):
        B, T1, F = query.shape
        T2 = key.shape[1]
        h, d_k = self.h, self.d_k

        # ---- projections (row-tiled Pallas matmuls, bf16 outputs); fused QKV
        #      for self-attention (weight concat precomputed in __init__)
        if (query is key) and (key is value):
            qkv = pallas_linear(query.reshape(B * T1, F), self._w_qkv, self._b_qkv)
            q2, k2, v2 = jnp.split(qkv, 3, axis=1)
            q = q2.reshape(B, T1, F)
            k = k2.reshape(B, T1, F)
            v = v2.reshape(B, T1, F)
        else:
            q = pallas_linear(query.reshape(B * T1, F), self._w_q_s, self._b_q_s).reshape(B, T1, F)
            k = pallas_linear(key.reshape(B * T2, F), self._w_k, self.b_k).reshape(B, T2, F)
            v = pallas_linear(value.reshape(B * T2, F), self._w_v, self.b_v).reshape(B, T2, F)

        Bpos, Tp, _ = pos_emb.shape
        assert Tp == T2, "pos_emb length must equal key length (no 2T-1 rel window / rel_shift)"
        assert Bpos in (1, B), "pos_emb batch must be 1 or B"
        p = pallas_linear(pos_emb.reshape(Bpos * Tp, F), self._w_pos,
                          self._zero_bias).reshape(Bpos, Tp, F)

        k4 = k.reshape(B, T2, h, d_k)
        p4 = p.reshape(Bpos, Tp, h, d_k)

        # ---- new_cache in the module's (B, H, T2, 2*d_k) contract (layout glue only)
        # TODO(synk): streaming `cache` concat path omitted (default empty cache).
        new_cache = None
        if need_cache:
            v4 = v.reshape(B, T2, h, d_k)
            new_cache = jnp.concatenate(
                [k4.transpose(0, 2, 1, 3), v4.transpose(0, 2, 1, 3)], axis=-1)

        # ---- rank-1 bias rows: u@k^T + v@p^T per (batch, head) -> tiny (B, H, T2)
        bias_rows = (jnp.einsum("hd,bthd->bht", self._pos_bias_u_s, k4)
                     + jnp.einsum("hd,bthd->bht", self._pos_bias_v_s, p4)
                     ).astype(jnp.float32)

        # ---- merged key+pos operand computed once (broadcast over batch if Bpos==1)
        kp = (k + p).astype(jnp.bfloat16)

        if mask is None or mask.shape[-1] == 0:
            mask = jnp.ones((B, 1, T2), jnp.int32)
        mask = mask.astype(jnp.int32)
        assert mask.shape[1] in (1, T1), "mask must be (B,1,T2) or (B,T1,T2)"

        # ---- fused relative-position attention, output already (B, T1, H*d_k)
        ctx = rel_attention(q, kp, v, bias_rows, mask, h, d_k)

        out = pallas_linear(ctx.reshape(B * T1, F), self._w_out, self.b_out,
                            out_dtype=jnp.float32)
        return out.reshape(B, T1, F), new_cache


# ------------------------------ reference (JAX) ------------------------------

def reference_forward(m, query, key, value, mask, pos_emb):
    """Plain-JAX f32 transcription of the torch forward (two score matmuls,
    explicit q_u/q_v), used to validate the merged-matmul bf16 Pallas path."""
    def lin(x, w, b):
        return x @ w + b

    B, T1, F = query.shape
    h, d_k = m.h, m.d_k
    q = lin(query, m.w_q, m.b_q).reshape(B, T1, h, d_k).transpose(0, 2, 1, 3)
    k = lin(key, m.w_k, m.b_k).reshape(B, -1, h, d_k).transpose(0, 2, 1, 3)
    v = lin(value, m.w_v, m.b_v).reshape(B, -1, h, d_k).transpose(0, 2, 1, 3)
    p = (pos_emb @ m.w_pos).reshape(pos_emb.shape[0], -1, h, d_k).transpose(0, 2, 1, 3)
    q_u = q + m.pos_bias_u[None, :, None, :]
    q_v = q + m.pos_bias_v[None, :, None, :]
    ac = jnp.einsum("bhqd,bhkd->bhqk", q_u, k)
    if p.shape[0] == 1:
        bd = jnp.einsum("bhqd,xhkd->bhqk", q_v, p)
    else:
        bd = jnp.einsum("bhqd,bhkd->bhqk", q_v, p)
    scores = (ac + bd) / math.sqrt(d_k)
    keep = (mask[:, None, :, :] != 0)
    scores = jnp.where(keep, scores, -1e30)
    attn = jax.nn.softmax(scores, axis=-1)
    attn = jnp.where(keep, attn, 0.0)
    ctx = jnp.einsum("bhqk,bhkd->bhqd", attn, v)
    x = ctx.transpose(0, 2, 1, 3).reshape(B, T1, h * d_k)
    return lin(x, m.w_out, m.b_out)


# ---------------------------------- main -------------------------------------

if __name__ == "__main__":
    B, T, n_head, n_feat = 2, 8, 4, 32   # d_k = 8
    key0 = jax.random.PRNGKey(0)
    k_mod, k_q, k_k, k_v, k_p = jax.random.split(key0, 5)

    mha = RelPositionMHA(n_head, n_feat, dropout_rate=0.0, key=k_mod)

    query = jax.random.normal(k_q, (B, T, n_feat), dtype=jnp.float32)
    key_t = jax.random.normal(k_k, (B, T, n_feat), dtype=jnp.float32)
    value = jax.random.normal(k_v, (B, T, n_feat), dtype=jnp.float32)
    pos_emb = jax.random.normal(k_p, (1, T, n_feat), dtype=jnp.float32)

    # mask: (B, 1, T2); 1 = keep, 0 = masked (torch passes bool, fills where eq(0))
    mask = jnp.ones((B, 1, T), dtype=jnp.int32)
    mask = mask.at[1, 0, T - 1].set(0)   # mask last key position of batch 1

    # cross-attention style call (separate q/k/v projections)
    out, new_cache = mha(query, key_t, value, mask, pos_emb)
    out = jax.block_until_ready(out)
    new_cache = jax.block_until_ready(new_cache)
    ref = reference_forward(mha, query, key_t, value, mask, pos_emb)
    assert out.shape == (B, T, n_feat)
    assert new_cache.shape == (B, n_head, T, 2 * (n_feat // n_head))
    # bf16 MXU operands + approx reciprocal -> looser tolerance than pure f32
    assert jnp.allclose(out, ref, atol=5e-2, rtol=5e-2), "mismatch (cross) vs JAX reference"

    # self-attention call (exercises the fused-QKV projection path)
    out_sa, _ = mha(query, query, query, mask, pos_emb)
    out_sa = jax.block_until_ready(out_sa)
    ref_sa = reference_forward(mha, query, query, query, mask, pos_emb)
    assert jnp.allclose(out_sa, ref_sa, atol=5e-2, rtol=5e-2), "mismatch (self) vs JAX reference"

    print("KERNEL_OK")
</pallas_src>

<mosaic_0001>
module attributes {stable_mosaic.version = 11 : i64} {
  func.func @_linear_kernel(%arg0: i32, %arg1: memref<16x32xf32, #tpu.memory_space<vmem>>, %arg2: memref<32x32xbf16, #tpu.memory_space<vmem>>, %arg3: memref<1x32xf32, #tpu.memory_space<vmem>>, %arg4: memref<16x32xbf16, #tpu.memory_space<vmem>>) attributes {dimension_semantics = [#tpu.dimension_semantics<parallel>], iteration_bounds = array<i64: 1>, scalar_prefetch = 0 : i64, scratch_operands = 0 : i64, tpu.core_type = #tpu.core_type<tc>, window_params = [{transform_indices = @transform_0, window_bounds = array<i64: 16, 32>}, {pipeline_mode = #tpu.pipeline_mode<synchronous>, transform_indices = @transform_1, window_bounds = array<i64: 32, 32>}, {pipeline_mode = #tpu.pipeline_mode<synchronous>, transform_indices = @transform_2, window_bounds = array<i64: 1, 32>}, {transform_indices = @transform_3, window_bounds = array<i64: 16, 32>}]} {
    %c0 = arith.constant 0 : index
    %c0_0 = arith.constant 0 : index
    %0 = vector.load %arg1[%c0, %c0_0] : memref<16x32xf32, #tpu.memory_space<vmem>>, vector<16x32xf32>
    %1 = arith.truncf %0 : vector<16x32xf32> to vector<16x32xbf16>
    %c0_1 = arith.constant 0 : index
    %c0_2 = arith.constant 0 : index
    %2 = vector.load %arg2[%c0_1, %c0_2] : memref<32x32xbf16, #tpu.memory_space<vmem>>, vector<32x32xbf16>
    %cst = arith.constant dense<0.000000e+00> : vector<16x32xf32>
    %3 = tpu.matmul %1, %2, %cst {dimension_numbers = #tpu.dot_dimension_numbers<[1], [0], [0], [1], [0, 0, 1, 1], [], []>} : vector<16x32xbf16>, vector<32x32xbf16>, vector<16x32xf32> -> vector<16x32xf32>
    %c0_3 = arith.constant 0 : index
    %c0_4 = arith.constant 0 : index
    %4 = vector.load %arg3[%c0_3, %c0_4] : memref<1x32xf32, #tpu.memory_space<vmem>>, vector<1x32xf32>
    %5 = vector.broadcast %4 : vector<1x32xf32> to vector<16x32xf32>
    %6 = arith.addf %3, %5 : vector<16x32xf32>
    %7 = arith.truncf %6 : vector<16x32xf32> to vector<16x32xbf16>
    %c0_5 = arith.constant 0 : index
    %c0_6 = arith.constant 0 : index
    %8 = vector.load %arg4[%c0_5, %c0_6] : memref<16x32xbf16, #tpu.memory_space<vmem>>, vector<16x32xbf16>
    tpu.vector_store %arg4[%c0_5, %c0_6], %7 {strides = array<i32>} : memref<16x32xbf16, #tpu.memory_space<vmem>>, vector<16x32xbf16>,
    return
  }
  func.func @transform_0(%arg0: i32) -> (i32, i32) {
    %c0_i32 = arith.constant 0 : i32
    %c0_i32_0 = arith.constant 0 : i32
    return %arg0, %c0_i32 : i32, i32
  }
  func.func @transform_1(%arg0: i32) -> (i32, i32) {
    %c0_i32 = arith.constant 0 : i32
    %c0_i32_0 = arith.constant 0 : i32
    %c0_i32_1 = arith.constant 0 : i32
    return %c0_i32, %c0_i32_0 : i32, i32
  }
  func.func @transform_2(%arg0: i32) -> (i32, i32) {
    %c0_i32 = arith.constant 0 : i32
    %c0_i32_0 = arith.constant 0 : i32
    %c0_i32_1 = arith.constant 0 : i32
    return %c0_i32, %c0_i32_0 : i32, i32
  }
  func.func @transform_3(%arg0: i32) -> (i32, i32) {
    %c0_i32 = arith.constant 0 : i32
    %c0_i32_0 = arith.constant 0 : i32
    return %arg0, %c0_i32 : i32, i32
  }
}

</mosaic_0001>

<llo_original>
// kernel: tpu_custom_call.1
$region0: #{tpu_custom_call.1}
  #allocation0 [shape = 'u32[]', space=smem, size = 0x4, offset = 0x4, fixed_abs, tag = 'smem constant byte address 0x4 - core index']
  #allocation1 [shape = 'u32[72,128]{1,0:T(1,128)}', space=vmem, size = 0x9000, scoped, tag = 'internal scratch']
  %s0 = inlined_call_operand.hbm [shape: f32[16,32], index: 0, kind: input, shape index: {}]
  %s1 = inlined_call_operand.hbm [shape: bf16[32,32], index: 1, kind: input, shape index: {}]
  %s2 = inlined_call_operand.vmem [shape: f32[1,32], index: 2, kind: input, shape index: {}]
  %s3 = inlined_call_operand.hbm [shape: bf16[16,32], index: 3, kind: output, shape index: {}]
  %s4 = sld [smem:[#allocation0]]
  $region30: #{tpu_custom_call.1} parent=0
    _
  %s6 = ssub.s32 1, %s4
  %s7 = scalar_select 0, %s6, %s4
  $region1: #{tpu_custom_call.1} parent=0
    #allocation2 [shape = 'u8[8192]{0}', space=vmem, size = 0x2000, scoped, tag = 'input window, operand 0, single buffered']
    #allocation3 [shape = 's32[1]{0}', space=sflag, size = 0x4, scoped, tag = 'scoped memory for tpu_custom_call.1']
    #allocation4 [shape = 's32[1]{0}', space=sflag, size = 0x4, scoped, tag = 'scoped memory for tpu_custom_call.1']
    #allocation5 [shape = 'u8[8192]{0}', space=vmem, size = 0x2000, scoped, tag = 'input window, operand 1, single buffered']
    #allocation6 [shape = 's32[1]{0}', space=sflag, size = 0x4, scoped, tag = 'scoped memory for tpu_custom_call.1']
    #allocation7 [shape = 'u8[4096]{0}', space=vmem, size = 0x1000, scoped, tag = 'output window, operand 0, single buffered']
    %8 = vsyncpa [#allocation3], 0
    %9 = vsyncpa [#allocation6], 0
    %10 = vsyncpa [#allocation4], 0
    // Predicated region
    $region2: #{tpu_custom_call.1} parent=1 // pred_check
      _
    $region3: #{tpu_custom_call.1} parent=1 // pred_check_branch
      %12 = sbr.rel (0) target = $region5
    $region4: #{tpu_custom_call.1} parent=1 // pred_region
      %14 = vsyncadd [#allocation3], 0
      %s15 = sshll.u32 %s0, 4
      %s16 = int_to_ptr.hbm [resolvable:$true] %s15
      %s17 = sshll.u32 [#allocation2], 4
      %s18 = int_to_ptr.vmem [resolvable:$true] %s17
      %23 = dma.hbm_to_vmem [thread:$0]  %s16, 256, %s18, [#allocation3], 128, 128, 8
    $region5: #{tpu_custom_call.1} parent=1 // pred_fallthru
      _
    // Predicated region
    $region6: #{tpu_custom_call.1} parent=1 // pred_check
      _
    $region7: #{tpu_custom_call.1} parent=1 // pred_check_branch
      %25 = sbr.rel (0) target = $region9
    $region8: #{tpu_custom_call.1} parent=1 // pred_region
      %27 = vsyncadd [#allocation6], 0
      %s28 = sshll.u32 %s1, 4
      %s29 = int_to_ptr.hbm [resolvable:$true] %s28
      %s30 = sshll.u32 [#allocation5], 4
      %s31 = int_to_ptr.vmem [resolvable:$true] %s30
      %36 = dma.hbm_to_vmem [thread:$0]  %s29, 256, %s31, [#allocation6], 64, 64, 4
    $region9: #{tpu_custom_call.1} parent=1 // pred_fallthru
      _
    // Predicated region
    $region10: #{tpu_custom_call.1} parent=1 // pred_check
      _
    $region11: #{tpu_custom_call.1} parent=1 // pred_check_branch
      %38 = sbr.rel (0) target = $region13
    $region12: #{tpu_custom_call.1} parent=1 // pred_region
      _
    $region13: #{tpu_custom_call.1} parent=1 // pred_fallthru
      _
    // Predicated region
    $region14: #{tpu_custom_call.1} parent=1 // pred_check
      _
    $region15: #{tpu_custom_call.1} parent=1 // pred_check_branch
      %40 = sbr.rel (0) target = $region17
    $region16: #{tpu_custom_call.1} parent=1 // pred_region
      %42 = dma.done [#allocation3], 256
    $region17: #{tpu_custom_call.1} parent=1 // pred_fallthru
      _
    // Predicated region
    $region18: #{tpu_custom_call.1} parent=1 // pred_check
      _
    $region19: #{tpu_custom_call.1} parent=1 // pred_check_branch
      %44 = sbr.rel (0) target = $region21
    $region20: #{tpu_custom_call.1} parent=1 // pred_region
      %46 = dma.done [#allocation6], 256
    $region21: #{tpu_custom_call.1} parent=1 // pred_fallthru
      _
    %v48 = vld [vmem:[#allocation2] sm:$0xff]
    %v49 = vld [vmem:[#allocation2 + $0x8] sm:$0xff]
    %v50 = vpack.c.bf16 %v49, %v48
    %v51 = vld [vmem:[#allocation5] sm:$0xf]
    %v52 = vld [vmem:[#allocation5 + $0x4] sm:$0xf]
    %v53 = vld [vmem:[#allocation5 + $0x8] sm:$0xf]
    %v54 = vld [vmem:[#allocation5 + $0xc] sm:$0xf]
    %v55 = vld [vmem:[%s2] sm:$0x1]
    %v57 = vperm.slane %v55, 0
    %v63 = vunpack.c.l.b16 %v51
    %v64 = vunpack.c.l.b16 %v52
    %v65 = vunpack.c.l.b16 %v53
    %v66 = vunpack.c.l.b16 %v54
    %v67 = vpack.c.b16 %v64, %v63
    %v68 = vpack.c.b16 %v66, %v65
    %vm71 = vcmask 261120
    %v73 = vsel %vm71, %v50, 0
    %75 = vmatpush.bf16.msra.mxu0 0
    %76 = vmatpush.bf16.msra.mxu0 0
    %77 = vmatpush.bf16.msra.mxu0 0
    %78 = vmatpush.bf16.msra.mxu0 0
    %79 = vmatpush.bf16.msra.mxu0 0
    %80 = vmatpush.bf16.msra.mxu0 0
    %81 = vmatpush.bf16.msra.mxu0 %v68
    %82 = vmatpush.bf16.msra.mxu0 %v67
    %83 = vmatmul.bf16.gmra.mxu0 %v73
    %v84 = vpop.f32.mrf.mxu0
    %v85 = vadd.f32 %v57, %v84
    %v86 = vpop.f32.mrf.mxu0
    %v87 = vadd.f32 %v57, %v86
    %88 = vdwg.mxu0
    %v89 = vpack.c.bf16 %v85, %v85
    %v90 = vpack.c.bf16 %v87, %v87
    %vm91 = vcmask 257024
    %92 = vst.msk [vmem:[#allocation7] sm:$0xf] %vm91, %v89
    %93 = vst.msk [vmem:[#allocation7 + $0x4] sm:$0xf] %vm91, %v90
    // Predicated region
    $region22: #{tpu_custom_call.1} parent=1 // pred_check
      _
    $region23: #{tpu_custom_call.1} parent=1 // pred_check_branch
      %95 = sbr.rel (0) target = $region25
    $region24: #{tpu_custom_call.1} parent=1 // pred_region
      %97 = vsyncadd [#allocation4], 0
      %s98 = sshll.u32 [#allocation7], 4
      %s99 = int_to_ptr.vmem [resolvable:$true] %s98
      %s100 = sshll.u32 %s3, 4
      %s101 = int_to_ptr.hbm [resolvable:$true] %s100
      %106 = dma.vmem_to_hbm [thread:$0]  %s99, 128, %s101, [#allocation4], 64, 64, 4
    $region25: #{tpu_custom_call.1} parent=1 // pred_fallthru
      _
    // Predicated region
    $region26: #{tpu_custom_call.1} parent=1 // pred_check
      _
    $region27: #{tpu_custom_call.1} parent=1 // pred_check_branch
      %108 = sbr.rel (0) target = $region29
    $region28: #{tpu_custom_call.1} parent=1 // pred_region
      %110 = dma.done [#allocation4], 128
    $region29: #{tpu_custom_call.1} parent=1 // pred_fallthru
      _
    %111 = vsyncpa [#allocation3], 1
    %112 = vsyncpa [#allocation6], 1
    %113 = vsyncpa [#allocation4], 1

</llo_original>
